<compile_context>
chip_gen: v6e
topology: v6e:2x2x1
jax: 0.10.0
libtpu: 0.0.40
codegen_flags: <defaults>
</compile_context>

<pallas_src>
import jax
import jax.numpy as jnp
from jax.experimental import pallas as pl
from jax.experimental.pallas import tpu as pltpu


def _mean_agg_kernel(x_ref, o_ref):
    # x_ref: (BN, T, BD) block; o_ref: (BN, BD)
    t = x_ref.shape[1]
    acc = jnp.sum(x_ref[...], axis=1, dtype=jnp.float32)   # f32 accumulation
    # NOTE: for integer inputs this truncates the f32 mean (PyTorch refuses
    # integer mean, so only float dtypes are expected here).
    o_ref[...] = (acc * (1.0 / t)).astype(o_ref.dtype)


def _round_up(a, b):
    return ((a + b - 1) // b) * b


def _cdiv(a, b):
    return -(-a // b)


def _vmem_capacity_bytes():
    try:
        info = pltpu.get_tpu_info()
        cap = getattr(info, "vmem_capacity_bytes", None)
        if cap:
            return int(cap)
    except Exception:
        pass
    return 64 * 1024 * 1024  # conservative default (v7x per-TC VMEM)


def _choose_tiles(n, t, d, in_dtype, out_dtype):
    """Pick (BN, BD, vmem_limit) so blocks are lane/sublane dense, each grid
    step moves a large (~14-24 MiB) input slab, and the double-buffered
    footprint stays comfortably inside this generation's VMEM."""
    vmem_cap = _vmem_capacity_bytes()
    # Headroom below physical VMEM: v7x 64 MiB -> 56 MiB; v5e/v6e 128 -> 100.
    vmem_limit = max(32 * 1024 * 1024, min(vmem_cap * 7 // 8, 100 * 1024 * 1024))
    budget = vmem_limit * 3 // 4          # for 2 * (in_block + out_block)
    target_in = min(24 * 1024 * 1024, budget // 3)

    in_item = jnp.dtype(in_dtype).itemsize
    out_item = jnp.dtype(out_dtype).itemsize
    # Native sublane tile grows for sub-32-bit dtypes (bf16: 16, int8/fp8: 32);
    # the second-minor block dim is padded to it in VMEM.
    sub_in = 8 * max(1, 4 // in_item)
    sub_out = 8 * max(1, 4 // out_item)

    def in_bytes(bn, bd):
        return bn * _round_up(t, sub_in) * _round_up(max(bd, 1), 128) * in_item

    def out_bytes(bn, bd):
        return _round_up(bn, sub_out) * _round_up(max(bd, 1), 128) * out_item

    def footprint(bn, bd):
        return 2 * (in_bytes(bn, bd) + out_bytes(bn, bd))

    # Lane tile: take the full feature width when reasonably small (one
    # contiguous T*D run per video, no ragged D blocks); otherwise a
    # 128-multiple chunk with a ragged last D block (no wrapper-side padding).
    bd_cap = 4096
    if _round_up(d, 128) <= bd_cap:
        bd = d                                # == full dim (always allowed)
    else:
        bd = bd_cap                           # 128-multiple tile

    bn_min = 8 if n >= 8 else n               # sublane-dense, or == full N
    # If even the minimum-height block blows the budget, shrink the lane tile.
    while _round_up(bd, 128) > 128 and footprint(bn_min, bd) > budget:
        bd = _round_up(bd, 128) // 2          # halve, stays a 128-multiple
    # TODO(synk): for extreme clip lengths (T in the thousands) a third
    # "arbitrary" T grid axis with an f32 VMEM accumulator would be needed;
    # not implemented since realistic clip lengths are tiny (8-64 frames).

    # Batch videos per grid step up to the target input-block size.
    bn = bn_min
    if n >= 8:
        n_cap = _round_up(n, 8)
        want = target_in // max(1, in_bytes(1, bd))
        bn = max(8, min(n_cap, (want // 8) * 8))
        while bn > 8 and footprint(bn, bd) > budget:
            bn = max(8, ((bn // 2) // 8) * 8)

    # Prefer >= 2 blocks so a 2-TC chip (v7x) can shard this mem-bound grid.
    if n >= 16 and _cdiv(n, bn) == 1 and _cdiv(d, bd) == 1:
        bn = max(8, _round_up(_cdiv(n, 2), 8))

    return bn, bd, int(vmem_limit)


def mean_aggregate(x, clip_length):
    """x: (N*T, *feat) -> (N, *feat), mean over the T (clip) axis."""
    bt = x.shape[0]
    assert bt % clip_length == 0, "leading dim must be divisible by clip_length"
    n = bt // clip_length
    feat_shape = x.shape[1:]
    d = 1
    for s in feat_shape:
        d *= s
    d = max(d, 1)

    x3 = x.reshape(n, clip_length, d)         # (N, T, D), free metadata reshape
    bn, bd, vmem_limit = _choose_tiles(n, clip_length, d, x.dtype, x.dtype)

    grid = (_cdiv(n, bn), _cdiv(d, bd))

    out = pl.pallas_call(
        _mean_agg_kernel,
        out_shape=jax.ShapeDtypeStruct((n, d), x.dtype),
        grid=grid,
        in_specs=[pl.BlockSpec((bn, clip_length, bd), lambda i, j: (i, 0, j))],
        out_specs=pl.BlockSpec((bn, bd), lambda i, j: (i, j)),
        compiler_params=pltpu.CompilerParams(
            dimension_semantics=("parallel", "parallel"),
            vmem_limit_bytes=vmem_limit,
        ),
    )(x3)

    return out.reshape((n,) + feat_shape)


if __name__ == "__main__":
    key = jax.random.PRNGKey(0)
    k1, k2, k3 = jax.random.split(key, 3)

    # Case 1: pooled per-frame embeddings (nvids=2, sampled_frames=8, hidden=128).
    nvids, clip_length, hidden = 2, 8, 128
    x1 = jax.random.normal(k1, (nvids * clip_length, hidden), dtype=jnp.float32)
    out1 = jax.block_until_ready(mean_aggregate(x1, clip_length))
    ref1 = x1.reshape(nvids, clip_length, hidden).mean(axis=1)
    assert out1.shape == (nvids, hidden)
    assert jnp.allclose(out1, ref1, atol=1e-5, rtol=1e-5)

    # Case 2: multi-axis feature map, flattened D=252 (not a 128-multiple):
    # exercises the bd == full-D path with NO wrapper-side padding.
    x2 = jax.random.normal(k2, (nvids * clip_length, 4, 7, 9), dtype=jnp.float32)
    out2 = jax.block_until_ready(mean_aggregate(x2, clip_length))
    ref2 = x2.reshape(nvids, clip_length, 4, 7, 9).mean(axis=1)
    assert out2.shape == (nvids, 4, 7, 9)
    assert jnp.allclose(out2, ref2, atol=1e-5, rtol=1e-5)

    # Case 3: bf16 input, N not a multiple of the 8-row block -> ragged N block
    # with masked output writes; f32 accumulation inside the kernel.
    nvids3, hidden3 = 10, 384
    x3 = jax.random.normal(
        k3, (nvids3 * clip_length, hidden3), dtype=jnp.float32
    ).astype(jnp.bfloat16)
    out3 = jax.block_until_ready(mean_aggregate(x3, clip_length))
    ref3 = x3.astype(jnp.float32).reshape(nvids3, clip_length, hidden3).mean(axis=1)
    assert out3.shape == (nvids3, hidden3)
    assert jnp.allclose(out3.astype(jnp.float32), ref3, atol=2e-2, rtol=2e-2)

    print("KERNEL_OK")
</pallas_src>

<mosaic_0001>
module attributes {stable_mosaic.version = 11 : i64} {
  func.func @_mean_agg_kernel(%arg0: i32, %arg1: i32, %arg2: memref<2x8x128xf32, #tpu.memory_space<vmem>>, %arg3: memref<2x128xf32, #tpu.memory_space<vmem>>) attributes {dimension_semantics = [#tpu.dimension_semantics<parallel>, #tpu.dimension_semantics<parallel>], iteration_bounds = array<i64: 1, 1>, scalar_prefetch = 0 : i64, scratch_operands = 0 : i64, tpu.core_type = #tpu.core_type<tc>, window_params = [{transform_indices = @transform_0, window_bounds = array<i64: 2, 8, 128>}, {transform_indices = @transform_1, window_bounds = array<i64: 2, 128>}]} {
    %c0 = arith.constant 0 : index
    %c0_0 = arith.constant 0 : index
    %c0_1 = arith.constant 0 : index
    %0 = vector.load %arg2[%c0, %c0_0, %c0_1] : memref<2x8x128xf32, #tpu.memory_space<vmem>>, vector<2x8x128xf32>
    %cst = arith.constant dense<0.000000e+00> : vector<2x128xf32>
    %1 = vector.multi_reduction <add>, %0, %cst [1] : vector<2x8x128xf32> to vector<2x128xf32>
    %cst_2 = arith.constant 1.250000e-01 : f32
    %2 = vector.broadcast %cst_2 : f32 to vector<2x128xf32>
    %3 = arith.mulf %1, %2 : vector<2x128xf32>
    %c0_3 = arith.constant 0 : index
    %c0_4 = arith.constant 0 : index
    %4 = vector.load %arg3[%c0_3, %c0_4] : memref<2x128xf32, #tpu.memory_space<vmem>>, vector<2x128xf32>
    tpu.vector_store %arg3[%c0_3, %c0_4], %3 {strides = array<i32>} : memref<2x128xf32, #tpu.memory_space<vmem>>, vector<2x128xf32>,
    return
  }
  func.func @transform_0(%arg0: i32, %arg1: i32) -> (i32, i32, i32) {
    %c0_i32 = arith.constant 0 : i32
    %c0_i32_0 = arith.constant 0 : i32
    return %arg0, %c0_i32, %arg1 : i32, i32, i32
  }
  func.func @transform_1(%arg0: i32, %arg1: i32) -> (i32, i32) {
    %c0_i32 = arith.constant 0 : i32
    return %arg0, %arg1 : i32, i32
  }
}

</mosaic_0001>

<llo_original>
// kernel: tpu_custom_call.1
$region0: #{tpu_custom_call.1}
  #allocation0 [shape = 'u32[]', space=smem, size = 0x4, offset = 0x4, fixed_abs, tag = 'smem constant byte address 0x4 - core index']
  #allocation1 [shape = 'u32[144,128]{1,0:T(1,128)}', space=vmem, size = 0x12000, scoped, tag = 'internal scratch']
  %s0 = inlined_call_operand.hbm [shape: f32[2,8,128], index: 0, kind: input, shape index: {}]
  %s1 = inlined_call_operand.hbm [shape: f32[2,128], index: 1, kind: output, shape index: {}]
  %s2 = sld [smem:[#allocation0]]
  $region18: #{tpu_custom_call.1} parent=0
    _
  %s4 = ssub.s32 1, %s2
  %s5 = scalar_select 0, %s4, %s2
  $region1: #{tpu_custom_call.1} parent=0
    #allocation2 [shape = 'u8[8192]{0}', space=vmem, size = 0x2000, scoped, tag = 'input window, operand 0, single buffered']
    #allocation3 [shape = 's32[1]{0}', space=sflag, size = 0x4, scoped, tag = 'scoped memory for tpu_custom_call.1']
    #allocation4 [shape = 's32[1]{0}', space=sflag, size = 0x4, scoped, tag = 'scoped memory for tpu_custom_call.1']
    #allocation5 [shape = 'u8[1024]{0}', space=vmem, size = 0x400, scoped, tag = 'output window, operand 0, single buffered']
    %6 = vsyncpa [#allocation3], 0
    %7 = vsyncpa [#allocation4], 0
    // Predicated region
    $region2: #{tpu_custom_call.1} parent=1 // pred_check
      _
    $region3: #{tpu_custom_call.1} parent=1 // pred_check_branch
      %9 = sbr.rel (0) target = $region5
    $region4: #{tpu_custom_call.1} parent=1 // pred_region
      %s11 = ssub.s32 256, 256
      %12 = vsyncadd [#allocation3], %s11
      %s13 = sshll.u32 [#allocation2], 4
      %s14 = int_to_ptr.vmem [resolvable:$true] %s13
      %19 = dma.hbm_to_vmem [thread:$0]  %s0, 256, %s14, [#allocation3], 128, 128, 8
    $region5: #{tpu_custom_call.1} parent=1 // pred_fallthru
      _
    // Predicated region
    $region6: #{tpu_custom_call.1} parent=1 // pred_check
      _
    $region7: #{tpu_custom_call.1} parent=1 // pred_check_branch
      %21 = sbr.rel (0) target = $region9
    $region8: #{tpu_custom_call.1} parent=1 // pred_region
      %22 = dma.done [#allocation3], 256
    $region9: #{tpu_custom_call.1} parent=1 // pred_fallthru
      _
    %v23 = vld [vmem:[#allocation2] sm:$0xff]
    %v24 = vld [vmem:[#allocation2 + $0x8] sm:$0xff]
    %v25 = vrot.slane %v23, 4
    %v26 = vadd.f32 %v23, %v25
    %v27 = vrot.slane %v26, 2
    %v28 = vadd.f32 %v26, %v27
    %v29 = vrot.slane %v28, 1
    %v30 = vadd.f32 %v28, %v29
    %v31 = vrot.slane %v24, 4
    %v32 = vadd.f32 %v24, %v31
    %v33 = vrot.slane %v32, 2
    %v34 = vadd.f32 %v32, %v33
    %v35 = vrot.slane %v34, 1
    %v36 = vadd.f32 %v34, %v35
    %v37 = vmul.f32 %v30, 0.125
    %v38 = vmul.f32 %v36, 0.125
    %vm41 = vcmask 1041409
    %v42 = vsel %vm41, %v38, %v37
    %44 = vst [vmem:[#allocation5] sm:$0x3] %v42
    // Predicated region
    $region10: #{tpu_custom_call.1} parent=1 // pred_check
      _
    $region11: #{tpu_custom_call.1} parent=1 // pred_check_branch
      %46 = sbr.rel (0) target = $region13
    $region12: #{tpu_custom_call.1} parent=1 // pred_region
      %s48 = ssub.s32 32, 32
      %49 = vsyncadd [#allocation4], %s48
      %s51 = sshll.u32 [#allocation5], 4
      %s52 = int_to_ptr.vmem [resolvable:$true] %s51
      %54 = dma.vmem_to_hbm [thread:$0]  %s52, 32, %s1, [#allocation4]
    $region13: #{tpu_custom_call.1} parent=1 // pred_fallthru
      _
    // Predicated region
    $region14: #{tpu_custom_call.1} parent=1 // pred_check
      _
    $region15: #{tpu_custom_call.1} parent=1 // pred_check_branch
      %56 = sbr.rel (0) target = $region17
    $region16: #{tpu_custom_call.1} parent=1 // pred_region
      %57 = dma.done [#allocation4], 32
    $region17: #{tpu_custom_call.1} parent=1 // pred_fallthru
      _
    %58 = vsyncpa [#allocation3], 1
    %59 = vsyncpa [#allocation4], 1

</llo_original>
